<compile_context>
chip_gen: v5e
topology: v5e:2x2
jax: 0.10.0
libtpu: 0.0.40
codegen_flags: <defaults>
</compile_context>

<pallas_src>
import jax
import jax.numpy as jnp
from jax import lax
from jax.experimental import pallas as pl
from jax.experimental.pallas import tpu as pltpu


def _readout_kernel(x_ref, w_ref, b_ref, o_ref):
    """Per-(batch-block, node-tile) readout.

    x_ref : (BB, K, TN)    de-interleaved history, node axis lane-dense
    w_ref : (Nout, K)      weights, VMEM-resident across the whole grid
    b_ref : (Nout, 1)      bias column (lane-broadcast over the node tile)
    o_ref : (BB, Nout, TN) lane-dense output tile
    """
    w = w_ref[...]
    bias = b_ref[...]
    # One depth-K MXU contraction per batch row (review: fold the 12 depth-2
    # dots into a single K=T*C contraction).  BB is small & static -> unrolled.
    for bb in range(x_ref.shape[0]):
        acc = lax.dot_general(
            w, x_ref[bb],
            dimension_numbers=(((1,), (0,)), ((), ())),
            preferred_element_type=jnp.float32)
        o_ref[bb] = (acc + bias).astype(o_ref.dtype)


def _choose_tiles(batch, num_nodes, k, nout, target_bytes=768 * 1024):
    """Pick (batch_block, node_tile): ~target_bytes of HBM traffic per grid step,
    lane-dense (multiple-of-128) node tiles, and >= 2 grid steps when possible
    (v7x shards 'parallel' grid axes across its two TensorCores)."""
    per_node = 4 * (k + nout)                       # x-read + y-write bytes / node
    if num_nodes <= 128:
        tn = num_nodes                              # block dim == full array dim
    else:
        tn = (target_bytes // per_node) // 128 * 128
        tn = int(min(max(tn, 128), -(-num_nodes // 128) * 128))
    bb = 1
    for d in range(2, batch + 1):                   # top up per-step bytes w/ batch
        if batch % d == 0 and d * tn * per_node <= target_bytes:
            bb = d
    steps = (batch // bb) * (-(-num_nodes // tn))
    if steps < 2:                                   # keep both v7x cores busy
        if num_nodes > 128:
            tn = max(128, -(-((num_nodes + 1) // 2) // 128) * 128)
        elif batch > 1:
            bb = max(d for d in range(1, batch) if batch % d == 0)
    return bb, tn


def base_model_forward(x, w, b, *, horizon, output_dim,
                       node_tile=None, batch_tile=None,
                       use_pallas=None, compute_dtype=None):
    """x: (B, seq_len, num_nodes, input_dim) -> (B, horizon, num_nodes, output_dim)."""
    B, T, N, C = x.shape
    K = T * C
    Nout = horizon * output_dim
    assert w.shape == (K, Nout)
    assert b.shape == (Nout,)

    # Tiny problems: custom-call + per-step overhead dominates; let XLA fuse it.
    if use_pallas is None:
        use_pallas = (B * N) >= 1024
    if not use_pallas:
        y = jnp.einsum('btnc,tcf->bfn', x, w.reshape(T, C, Nout)) + b[None, :, None]
        return jnp.transpose(y.reshape(B, horizon, output_dim, N), (0, 1, 3, 2))

    dt = jnp.dtype(compute_dtype) if compute_dtype is not None else x.dtype

    # One wrapper de-interleave pass over x: (B, T, N, C) -> (B, K, N) puts the
    # node axis in the lane dimension of every kernel tile (lane-dense VMEM,
    # full-width vld's).  The optional bf16 cast fuses into the same copy.
    x_t = jnp.transpose(x, (0, 1, 3, 2)).reshape(B, K, N).astype(dt)
    w2 = jnp.transpose(w).astype(dt)                 # (Nout, K), VMEM-resident
    b2 = b.reshape(Nout, 1).astype(jnp.float32)      # (Nout, 1)

    bb, tn = _choose_tiles(B, N, K, Nout)
    if batch_tile is not None:
        bb = batch_tile
    if node_tile is not None:
        tn = node_tile
    assert B % bb == 0
    grid = (B // bb, pl.cdiv(N, tn))

    itemsize = jnp.dtype(dt).itemsize
    cost = pl.CostEstimate(
        flops=2 * B * N * K * Nout,
        transcendentals=0,
        bytes_accessed=int(B * K * N * itemsize + Nout * K * itemsize
                           + Nout * 4 + B * Nout * N * 4),
    )

    out3 = pl.pallas_call(
        _readout_kernel,
        out_shape=jax.ShapeDtypeStruct((B, Nout, N), x.dtype),
        grid=grid,
        in_specs=[
            # x_t is the only streamed operand.  (If its DMA is still exposed at
            # large tiles, pipeline_mode=pl.Buffered(3) is the next knob.)
            pl.BlockSpec((bb, K, tn), lambda bi, ni: (bi, 0, ni)),
            # Weights / bias: constant index_map -> stay resident in VMEM.
            pl.BlockSpec((Nout, K), lambda bi, ni: (0, 0)),
            pl.BlockSpec((Nout, 1), lambda bi, ni: (0, 0)),
        ],
        # Lane-dense output: node axis in the lane dim -> unmasked vst (only a
        # ragged final tile, if any, is boundary-masked; no jnp.pad / slice).
        out_specs=pl.BlockSpec((bb, Nout, tn), lambda bi, ni: (bi, 0, ni)),
        compiler_params=pltpu.CompilerParams(
            dimension_semantics=("parallel", "parallel")),
        cost_estimate=cost,
    )(x_t, w2, b2)

    # (B, H*Cout, N) -> (B, H, N, Cout); a free reshape when output_dim == 1.
    # TODO(synk): for output_dim > 1 this transpose is an extra HBM pass over y;
    # emit (node, cout)-interleaved output lanes from the kernel if that matters.
    out = out3.reshape(B, horizon, output_dim, N)
    return jnp.transpose(out, (0, 1, 3, 2))


def param_num(params):
    """JAX analogue of BaseModel.param_num: total number of parameter elements."""
    return sum(p.size for p in jax.tree_util.tree_leaves(params))


if __name__ == "__main__":
    # Small shapes consistent with the BaseModel constructor fields.
    batch = 2
    num_nodes = 256
    seq_len = 12
    horizon = 12
    input_dim = 2
    output_dim = 1

    key = jax.random.PRNGKey(0)
    kx, kw, kb = jax.random.split(key, 3)

    x = jax.random.normal(
        kx, (batch, seq_len, num_nodes, input_dim), dtype=jnp.float32)
    # Deterministic parameter init (synthetic — no checkpoint load).
    w = (jax.random.normal(kw, (seq_len * input_dim, horizon * output_dim),
                           dtype=jnp.float32) * 0.1)
    b = jax.random.normal(kb, (horizon * output_dim,), dtype=jnp.float32) * 0.01

    # Force the Pallas path so the kernel itself is exercised at demo size.
    y = base_model_forward(x, w, b, horizon=horizon, output_dim=output_dim,
                           use_pallas=True)
    y = jax.block_until_ready(y)

    # Reference check in plain JAX (same (M, K) x (K, Nout) readout math).
    x2d = jnp.transpose(x, (0, 2, 1, 3)).reshape(batch * num_nodes, -1)
    ref = (x2d @ w + b).reshape(batch, num_nodes, horizon, output_dim)
    ref = jnp.transpose(ref, (0, 2, 1, 3))

    assert y.shape == (batch, horizon, num_nodes, output_dim)
    # f32 matmuls on the TPU MXU run at reduced (bf16-pass) precision by default
    # on both sides; compare with a tolerance that covers that.
    assert jnp.allclose(y, ref, atol=1e-2, rtol=1e-2), \
        float(jnp.max(jnp.abs(y - ref)))
    assert param_num([w, b]) == w.size + b.size

    print("KERNEL_OK")
</pallas_src>

<mosaic_0001>
module attributes {stable_mosaic.version = 11 : i64} {
  func.func @_readout_kernel(%arg0: i32, %arg1: i32, %arg2: memref<2x24x128xf32, #tpu.memory_space<vmem>>, %arg3: memref<12x24xf32, #tpu.memory_space<vmem>>, %arg4: memref<12x1xf32, #tpu.memory_space<vmem>>, %arg5: memref<2x12x128xf32, #tpu.memory_space<vmem>>) attributes {dimension_semantics = [#tpu.dimension_semantics<parallel>, #tpu.dimension_semantics<parallel>], iteration_bounds = array<i64: 1, 2>, scalar_prefetch = 0 : i64, scratch_operands = 0 : i64, tpu.core_type = #tpu.core_type<tc>, window_params = [{transform_indices = @transform_0, window_bounds = array<i64: 2, 24, 128>}, {pipeline_mode = #tpu.pipeline_mode<synchronous>, transform_indices = @transform_1, window_bounds = array<i64: 12, 24>}, {pipeline_mode = #tpu.pipeline_mode<synchronous>, transform_indices = @transform_2, window_bounds = array<i64: 12, 1>}, {transform_indices = @transform_3, window_bounds = array<i64: 2, 12, 128>}]} {
    %c0 = arith.constant 0 : index
    %c0_0 = arith.constant 0 : index
    %0 = vector.load %arg3[%c0, %c0_0] : memref<12x24xf32, #tpu.memory_space<vmem>>, vector<12x24xf32>
    %c0_1 = arith.constant 0 : index
    %c0_2 = arith.constant 0 : index
    %1 = vector.load %arg4[%c0_1, %c0_2] : memref<12x1xf32, #tpu.memory_space<vmem>>, vector<12x1xf32>
    %c0_3 = arith.constant 0 : index
    %c0_4 = arith.constant 0 : index
    %c0_5 = arith.constant 0 : index
    %2 = vector.load %arg2[%c0_3, %c0_4, %c0_5] : memref<2x24x128xf32, #tpu.memory_space<vmem>>, vector<1x24x128xf32>
    %3 = vector.shape_cast %2 : vector<1x24x128xf32> to vector<24x128xf32>
    %cst = arith.constant dense<0.000000e+00> : vector<12x128xf32>
    %4 = tpu.matmul %0, %3, %cst {dimension_numbers = #tpu.dot_dimension_numbers<[1], [0], [0], [1], [0, 0, 1, 1], [], []>} : vector<12x24xf32>, vector<24x128xf32>, vector<12x128xf32> -> vector<12x128xf32>
    %5 = vector.broadcast %1 : vector<12x1xf32> to vector<12x128xf32>
    %6 = arith.addf %4, %5 : vector<12x128xf32>
    %c0_6 = arith.constant 0 : index
    %c0_7 = arith.constant 0 : index
    %c0_8 = arith.constant 0 : index
    %7 = vector.load %arg5[%c0_6, %c0_7, %c0_8] : memref<2x12x128xf32, #tpu.memory_space<vmem>>, vector<1x12x128xf32>
    %8 = vector.shape_cast %7 : vector<1x12x128xf32> to vector<12x128xf32>
    %9 = vector.shape_cast %6 : vector<12x128xf32> to vector<1x12x128xf32>
    tpu.vector_store %arg5[%c0_6, %c0_7, %c0_8], %9 {strides = array<i32>} : memref<2x12x128xf32, #tpu.memory_space<vmem>>, vector<1x12x128xf32>,
    %c1 = arith.constant 1 : index
    %c0_9 = arith.constant 0 : index
    %c0_10 = arith.constant 0 : index
    %10 = vector.load %arg2[%c1, %c0_9, %c0_10] : memref<2x24x128xf32, #tpu.memory_space<vmem>>, vector<1x24x128xf32>
    %11 = vector.shape_cast %10 : vector<1x24x128xf32> to vector<24x128xf32>
    %cst_11 = arith.constant dense<0.000000e+00> : vector<12x128xf32>
    %12 = tpu.matmul %0, %11, %cst_11 {dimension_numbers = #tpu.dot_dimension_numbers<[1], [0], [0], [1], [0, 0, 1, 1], [], []>} : vector<12x24xf32>, vector<24x128xf32>, vector<12x128xf32> -> vector<12x128xf32>
    %13 = vector.broadcast %1 : vector<12x1xf32> to vector<12x128xf32>
    %14 = arith.addf %12, %13 : vector<12x128xf32>
    %c1_12 = arith.constant 1 : index
    %c0_13 = arith.constant 0 : index
    %c0_14 = arith.constant 0 : index
    %15 = vector.load %arg5[%c1_12, %c0_13, %c0_14] : memref<2x12x128xf32, #tpu.memory_space<vmem>>, vector<1x12x128xf32>
    %16 = vector.shape_cast %15 : vector<1x12x128xf32> to vector<12x128xf32>
    %17 = vector.shape_cast %14 : vector<12x128xf32> to vector<1x12x128xf32>
    tpu.vector_store %arg5[%c1_12, %c0_13, %c0_14], %17 {strides = array<i32>} : memref<2x12x128xf32, #tpu.memory_space<vmem>>, vector<1x12x128xf32>,
    return
  }
  func.func @transform_0(%arg0: i32, %arg1: i32) -> (i32, i32, i32) {
    %c0_i32 = arith.constant 0 : i32
    %c0_i32_0 = arith.constant 0 : i32
    return %arg0, %c0_i32, %arg1 : i32, i32, i32
  }
  func.func @transform_1(%arg0: i32, %arg1: i32) -> (i32, i32) {
    %c0_i32 = arith.constant 0 : i32
    %c0_i32_0 = arith.constant 0 : i32
    %c0_i32_1 = arith.constant 0 : i32
    return %c0_i32, %c0_i32_0 : i32, i32
  }
  func.func @transform_2(%arg0: i32, %arg1: i32) -> (i32, i32) {
    %c0_i32 = arith.constant 0 : i32
    %c0_i32_0 = arith.constant 0 : i32
    %c0_i32_1 = arith.constant 0 : i32
    return %c0_i32, %c0_i32_0 : i32, i32
  }
  func.func @transform_3(%arg0: i32, %arg1: i32) -> (i32, i32, i32) {
    %c0_i32 = arith.constant 0 : i32
    %c0_i32_0 = arith.constant 0 : i32
    return %arg0, %c0_i32, %arg1 : i32, i32, i32
  }
}

</mosaic_0001>

<llo_original>
// kernel: tpu_custom_call.1
$region0: #{tpu_custom_call.1}
  #allocation0 [shape = 'u32[]', space=smem, size = 0x4, offset = 0x4, fixed_abs, tag = 'smem constant byte address 0x4 - core index']
  #allocation1 [shape = 'u32[72,128]{1,0:T(1,128)}', space=vmem, size = 0x9000, scoped, tag = 'internal scratch']
  %s0 = inlined_call_operand.hbm [shape: f32[2,24,256], index: 0, kind: input, shape index: {}]
  %s1 = inlined_call_operand.vmem [shape: f32[12,24], index: 1, kind: input, shape index: {}]
  %s2 = inlined_call_operand.vmem [shape: f32[12,1], index: 2, kind: input, shape index: {}]
  %s3 = inlined_call_operand.vmem [shape: f32[2,12,256], index: 3, kind: output, shape index: {}]
  %s4 = sld [smem:[#allocation0]]
  $region83: #{tpu_custom_call.1} parent=0
    _
  %s6 = ssub.s32 1, %s4
  %s7 = scalar_select 0, %s6, %s4
  $region1: #{tpu_custom_call.1} parent=0
    #allocation2 [shape = 'u8[49152]{0}', space=vmem, size = 0xc000, scoped, tag = 'input window, operand 0']
    #allocation3 [shape = 's32[2]{0}', space=sflag, size = 0x8, scoped, tag = 'scoped memory for tpu_custom_call.1']
    #allocation4 [shape = 'u8[32768]{0}', space=vmem, size = 0x8000, scoped, tag = 'output window, operand 0']
    %8 = vsyncpa [#allocation3], 0
    %s9 = scalar_lea.sflag [#allocation3], 1
    %10 = vsyncpa %s9, 0
    loop: start=0, step=1, limit=4
    $region2: #{tpu_custom_call.1} parent=1 // loop_pre_header
      _
    $region3: #{tpu_custom_call.1} parent=1 // loop_header
      %s12 = sphi 0, %s16
      %p13 = scmp.ge.s32.totalorder %s12, 4
      %s19 = sphi 0, %s31
      %s20 = sphi 0, %s27
      %s21 = sphi 0, %s19
      %s22 = sphi 0, %s20
      %s23 = sphi 0, %s21
      %s24 = sphi 0, %s22
      %s36 = sphi 0, %s38
      %s39 = sphi 0, %s36
      %s40 = sphi 0, %s39
      %s56 = sphi 0, %s40
      %s60 = sphi 0, %s60
      %s62 = sphi 0, %s60
      %s63 = sphi 0, %s62
      %s77 = sphi 0, %s63
      %s81 = sphi 0, %s81
      %s83 = sphi 0, %s81
      %s84 = sphi 0, %s83
      %s98 = sphi 0, %s84
      %s106 = sphi 0, %s108
      %s109 = sphi 0, %s106
      %s110 = sphi 0, %s109
      %s126 = sphi 0, %s110
    $region4: #{tpu_custom_call.1} parent=1 // loop_header_branch
      %15 = sbr.rel (%p13) target = $region8
    $region5: #{tpu_custom_call.1} parent=1 // loop_body
      %s17 = ssub.s32 %s12, 1
      %s18 = ssub.s32 %s12, 2
      %s25 = sadd.s32 1, %s20
      %p26 = scmp.ge.s32.totalorder %s25, 2
      %s27 = scalar_select %p26, 0, %s25
      %s28 = sadd.s32 1, %s19
      %s29 = scalar_select %p26, %s28, %s19
      %p30 = scmp.ge.s32.totalorder %s29, 1
      %s31 = scalar_select %p30, 0, %s29
      %s32 = ssub.s32 %s19, %s31
      %s33 = ssub.s32 %s20, %s27
      %s34 = sor.u32 %s32, %s33
      %p35 = scmp.eq.s32.totalorder %s34, 0
      %s37 = sadd.s32 %s36, 1
      %s38 = scalar_select %p35, %s36, %s37
      %p41 = pneg %p35
      %p42 = scmp.eq.s32.totalorder %s12, 1
      %p43 = por %p41, %p42
      %p44 = scmp.ne.s32.totalorder %s36, %s39
      %p45 = scmp.eq.s32.totalorder %s12, 0
      %p46 = por %p44, %p45
      %p47 = scmp.ne.s32.totalorder %s36, %s39
      %p48 = scmp.eq.s32.totalorder %s17, 1
      %p49 = por %p47, %p48
      %p50 = scmp.ne.s32.totalorder %s39, %s40
      %p51 = scmp.eq.s32.totalorder %s17, 0
      %p52 = por %p50, %p51
      %p53 = scmp.ne.s32.totalorder %s39, %s40
      %p54 = scmp.eq.s32.totalorder %s18, 1
      %p55 = por %p53, %p54
      %p57 = scmp.ne.s32.totalorder %s40, %s56
      %p58 = scmp.eq.s32.totalorder %s18, 0
      %p59 = por %p57, %p58
      %s61 = sadd.s32 %s60, 1
      %p64 = scmp.eq.s32.totalorder %s12, 1
      %p65 = scmp.ne.s32.totalorder %s60, %s62
      %p66 = scmp.eq.s32.totalorder %s12, 0
      %p67 = por %p65, %p66
      %p68 = scmp.ne.s32.totalorder %s60, %s62
      %p69 = scmp.eq.s32.totalorder %s17, 1
      %p70 = por %p68, %p69
      %p71 = scmp.ne.s32.totalorder %s62, %s63
      %p72 = scmp.eq.s32.totalorder %s17, 0
      %p73 = por %p71, %p72
      %p74 = scmp.ne.s32.totalorder %s62, %s63
      %p75 = scmp.eq.s32.totalorder %s18, 1
      %p76 = por %p74, %p75
      %p78 = scmp.ne.s32.totalorder %s63, %s77
      %p79 = scmp.eq.s32.totalorder %s18, 0
      %p80 = por %p78, %p79
      %s82 = sadd.s32 %s81, 1
      %p85 = scmp.eq.s32.totalorder %s12, 1
      %p86 = scmp.ne.s32.totalorder %s81, %s83
      %p87 = scmp.eq.s32.totalorder %s12, 0
      %p88 = por %p86, %p87
      %p89 = scmp.ne.s32.totalorder %s81, %s83
      %p90 = scmp.eq.s32.totalorder %s17, 1
      %p91 = por %p89, %p90
      %p92 = scmp.ne.s32.totalorder %s83, %s84
      %p93 = scmp.eq.s32.totalorder %s17, 0
      %p94 = por %p92, %p93
      %p95 = scmp.ne.s32.totalorder %s83, %s84
      %p96 = scmp.eq.s32.totalorder %s18, 1
      %p97 = por %p95, %p96
      %p99 = scmp.ne.s32.totalorder %s84, %s98
      %p100 = scmp.eq.s32.totalorder %s18, 0
      %p101 = por %p99, %p100
      %s102 = ssub.s32 %s19, %s31
      %s103 = ssub.s32 %s20, %s27
      %s104 = sor.u32 %s102, %s103
      %p105 = scmp.eq.s32.totalorder %s104, 0
      %s107 = sadd.s32 %s106, 1
      %s108 = scalar_select %p105, %s106, %s107
      %p111 = pneg %p105
      %p112 = scmp.eq.s32.totalorder %s12, 1
      %p113 = por %p111, %p112
      %p114 = scmp.ne.s32.totalorder %s106, %s109
      %p115 = scmp.eq.s32.totalorder %s12, 0
      %p116 = por %p114, %p115
      %p117 = scmp.ne.s32.totalorder %s106, %s109
      %p118 = scmp.eq.s32.totalorder %s17, 1
      %p119 = por %p117, %p118
      %p120 = scmp.ne.s32.totalorder %s109, %s110
      %p121 = scmp.eq.s32.totalorder %s17, 0
      %p122 = por %p120, %p121
      %p123 = scmp.ne.s32.totalorder %s109, %s110
      %p124 = scmp.eq.s32.totalorder %s18, 1
      %p125 = por %p123, %p124
      %p127 = scmp.ne.s32.totalorder %s110, %s126
      %p128 = scmp.eq.s32.totalorder %s18, 0
      %p129 = por %p127, %p128
      %p130 = scmp.le.s32.totalorder 1, %s12
      %p131 = scmp.lt.s32.totalorder %s12, 3
      %p132 = pnand %p130, %p131
      %p133 = pneg %p132
      // Predicated region
      $region9: #{tpu_custom_call.1} parent=5 // pred_check
        _
      $region10: #{tpu_custom_call.1} parent=5 // pred_check_branch
        %135 = sbr.rel (%p132) target = $region12
      $region11: #{tpu_custom_call.1} parent=5 // pred_region
        %s136 = ssub.s32 %s12, 1
        // Predicated region
        $region13: #{tpu_custom_call.1} parent=11 // pred_check
          %p137 = pneg %p73
        $region14: #{tpu_custom_call.1} parent=11 // pred_check_branch
          %139 = sbr.rel (%p137) target = $region16
        $region15: #{tpu_custom_call.1} parent=11 // pred_region
          _
        $region16: #{tpu_custom_call.1} parent=11 // pred_fallthru
          _
        // Predicated region
        $region17: #{tpu_custom_call.1} parent=11 // pred_check
          %p140 = pneg %p94
        $region18: #{tpu_custom_call.1} parent=11 // pred_check_branch
          %142 = sbr.rel (%p140) target = $region20
        $region19: #{tpu_custom_call.1} parent=11 // pred_region
          _
        $region20: #{tpu_custom_call.1} parent=11 // pred_fallthru
          _
      $region12: #{tpu_custom_call.1} parent=5 // pred_fallthru
        _
      %p143 = scmp.lt.s32.totalorder %s12, 2
      // Predicated region
      $region21: #{tpu_custom_call.1} parent=5 // pred_check
        %p144 = pneg %p143
      $region22: #{tpu_custom_call.1} parent=5 // pred_check_branch
        %146 = sbr.rel (%p144) target = $region24
      $region23: #{tpu_custom_call.1} parent=5 // pred_region
        // Predicated region
        $region25: #{tpu_custom_call.1} parent=23 // pred_check
          %p147 = pneg %p46
        $region26: #{tpu_custom_call.1} parent=23 // pred_check_branch
          %149 = sbr.rel (%p147) target = $region28
        $region27: #{tpu_custom_call.1} parent=23 // pred_region
          %s150 = sand.u32 %s36, 1
          %s151 = scalar_lea.sflag [#allocation3], %s150
          %s152 = sand.u32 %s36, 1
          %s153 = smul.addr %s152, 48
          %s154 = scalar_lea.vmem [#allocation2], %s153
          %s155 = smul.u32 2, %s19
          %157 = vsyncadd %s151, 0
          %s158 = smul.addr %s155, 6
          %s159 = sadd.s32 %s20, %s158
          %s160 = smul.addr %s159, 8
          %s161 = scalar_lea.hbm %s0, %s160
          %s162 = sshll.u32 %s161, 4
          %s163 = int_to_ptr.hbm [resolvable:$true] %s162
          %s164 = sshll.u32 %s154, 4
          %s165 = int_to_ptr.vmem [resolvable:$true] %s164
          %170 = dma.hbm_to_vmem [thread:$0]  %s163, 768, %s165, %s151, 256, 128, 8
        $region28: #{tpu_custom_call.1} parent=23 // pred_fallthru
          _
      $region24: #{tpu_custom_call.1} parent=5 // pred_fallthru
        _
      %p171 = scmp.le.s32.totalorder 1, %s12
      %p172 = scmp.lt.s32.totalorder %s12, 3
      %p173 = pnand %p171, %p172
      %p174 = pneg %p173
      // Predicated region
      $region29: #{tpu_custom_call.1} parent=5 // pred_check
        _
      $region30: #{tpu_custom_call.1} parent=5 // pred_check_branch
        %176 = sbr.rel (%p173) target = $region32
      $region31: #{tpu_custom_call.1} parent=5 // pred_region
        %s177 = ssub.s32 %s12, 1
        %s178 = sand.u32 %s39, 1
        %s179 = scalar_lea.sflag [#allocation3], %s178
        %s180 = sand.u32 %s39, 1
        %s181 = smul.addr %s180, 48
        %s182 = scalar_lea.vmem [#allocation2], %s181
        // Predicated region
        $region33: #{tpu_custom_call.1} parent=31 // pred_check
          %p183 = pneg %p52
        $region34: #{tpu_custom_call.1} parent=31 // pred_check_branch
          %185 = sbr.rel (%p183) target = $region36
        $region35: #{tpu_custom_call.1} parent=31 // pred_region
          %187 = dma.done %s179, 768
        $region36: #{tpu_custom_call.1} parent=31 // pred_fallthru
          _
        %s188 = sand.u32 %s39, 1
        %s189 = scalar_lea.sflag [#allocation3], %s188
        %s190 = sand.u32 %s39, 1
        %s191 = smul.addr %s190, 48
        %s192 = scalar_lea.vmem [#allocation2], %s191
        %p193 = pneg %p52
        %p194 = pneg %p49
        %p195 = pneg %p73
        %p196 = pneg %p70
        %p197 = pneg %p94
        %p198 = pneg %p91
        %p199 = pneg %p122
        %p200 = pneg %p119
        %s201 = sand.u32 %s109, 1
        %s202 = sand.u32 %s109, 1
        %s203 = smul.addr %s202, 32
        %s204 = scalar_lea.vmem [#allocation4], %s203
        %s205 = smul.u32 2, %s21
        %s206 = smul.u32 2, %s21
        %v207 = vld [vmem:[%s1] sm:$0xff]
        %v208 = vld [vmem:[%s1 + $0x8] sm:$0xf]
        %v209 = vld [vmem:[%s2] sm:$0xff]
        %v210 = vld [vmem:[%s2 + $0x8] sm:$0xf]
        %v211 = vld [vmem:[%s182] sm:$0xff]
        %v212 = vld [vmem:[%s182 + $0x8] sm:$0xff]
        %v213 = vld [vmem:[%s182 + $0x10] sm:$0xff]
        %215 = vset.pattern.permute.xlu0 0
        %216 = vperm.xlu0 %215, %v209
        %v217 = vpop.permute.xlu0 %216
        %220 = vset.pattern.permute.xlu0 0
        %221 = vperm.xlu0 %220, %v210
        %v222 = vpop.permute.xlu0 %221
        %vm224 = vcmask 195584
        %v226 = vsel %vm224, %v207, 0
        %v229 = vsel %vm224, %v208, 0
        %231 = vmatpush.msra.mxu0 0.0
        %232 = vmatpush.msra.mxu0 0.0
        %233 = vmatpush.msra.mxu0 0.0
        %234 = vmatpush.msra.mxu0 0.0
        %235 = vmatpush.msra.mxu0 0.0
        %236 = vmatpush.msra.mxu0 0.0
        %237 = vmatpush.msra.mxu0 0.0
        %238 = vmatpush.msra.mxu0 0.0
        %239 = vmatpush.msra.mxu0 0.0
        %240 = vmatpush.msra.mxu0 0.0
        %241 = vmatpush.msra.mxu0 0.0
        %242 = vmatpush.msra.mxu0 0.0
        %243 = vmatpush.msra.mxu0 0.0
        %244 = vmatpush.msra.mxu0 %v213
        %245 = vmatpush.msra.mxu0 %v212
        %246 = vmatpush.msra.mxu0 %v211
        %247 = vmatmul.f32.gmra.mxu0 %v226
        %v248 = vpop.f32.mrf.mxu0
        %v249 = vadd.f32 %v217, %v248
        %250 = vmatmul.f32.gmra.mxu0 %v229
        %v251 = vpop.f32.mrf.mxu0
        %v252 = vadd.f32 %v222, %v251
        %253 = vdwg.mxu0
        %254 = vst [vmem:[%s204] sm:$0xff] %v249
        %255 = vst [vmem:[%s204 + $0x8] sm:$0xf] %v252
        %s256 = scalar_lea.vmem %s182, 24 [#allocation2]
        %v257 = vld [vmem:[%s256] sm:$0xff]
        %v258 = vld [vmem:[%s256 + $0x8] sm:$0xff]
        %v259 = vld [vmem:[%s256 + $0x10] sm:$0xff]
        %260 = vmatpush.msra.mxu0 0.0
        %261 = vmatpush.msra.mxu0 0.0
        %262 = vmatpush.msra.mxu0 0.0
        %263 = vmatpush.msra.mxu0 0.0
        %264 = vmatpush.msra.mxu0 0.0
        %265 = vmatpush.msra.mxu0 0.0
        %266 = vmatpush.msra.mxu0 0.0
        %267 = vmatpush.msra.mxu0 0.0
        %268 = vmatpush.msra.mxu0 0.0
        %269 = vmatpush.msra.mxu0 0.0
        %270 = vmatpush.msra.mxu0 0.0
        %271 = vmatpush.msra.mxu0 0.0
        %272 = vmatpush.msra.mxu0 0.0
        %273 = vmatpush.msra.mxu0 %v259
        %274 = vmatpush.msra.mxu0 %v258
        %275 = vmatpush.msra.mxu0 %v257
        %276 = vmatmul.f32.gmra.mxu0 %v226
        %v277 = vpop.f32.mrf.mxu0
        %v278 = vadd.f32 %v217, %v277
        %279 = vmatmul.f32.gmra.mxu0 %v229
        %v280 = vpop.f32.mrf.mxu0
        %v281 = vadd.f32 %v222, %v280
        %282 = vdwg.mxu0
        %s283 = scalar_lea.vmem %s204, 16 [#allocation4]
        %284 = vst [vmem:[%s283] sm:$0xff] %v278
        %285 = vst [vmem:[%s283 + $0x8] sm:$0xf] %v281
        %s286 = sand.u32 %s109, 1
        %s287 = sand.u32 %s109, 1
        %s288 = smul.addr %s287, 32
        %s289 = scalar_lea.vmem [#allocation4], %s288
        // Predicated region
        $region37: #{tpu_custom_call.1} parent=31 // pred_check
          %p290 = pneg %p119
        $region38: #{tpu_custom_call.1} parent=31 // pred_check_branch
          %292 = sbr.rel (%p290) target = $region40
        $region39: #{tpu_custom_call.1} parent=31 // pred_region
          %s293 = smul.u32 2, %s21
          %s294 = smul.addr %s293, 4
          %s295 = sadd.s32 %s22, %s294
          %s296 = smul.addr %s295, 8
          %s297 = scalar_lea.vmem %s3, %s296
          // Predicated region
          $region41: #{tpu_custom_call.1} parent=39 // pred_check
            _
          $region42: #{tpu_custom_call.1} parent=39 // pred_check_branch
            %299 = sbr.rel (0) target = $region44
          $region43: #{tpu_custom_call.1} parent=39 // pred_region
            // Predicated region
            $region45: #{tpu_custom_call.1} parent=43 // pred_check
              _
            $region46: #{tpu_custom_call.1} parent=43 // pred_check_branch
              %301 = sbr.rel (0) target = $region48
            $region47: #{tpu_custom_call.1} parent=43 // pred_region
              // Predicated region
              $region60: #{tpu_custom_call.1} parent=47 // pred_check
                _
              $region61: #{tpu_custom_call.1} parent=47 // pred_check_branch
                %323 = sbr.rel (0) target = $region63
              $region62: #{tpu_custom_call.1} parent=47 // pred_region
                loop: start=0, step=1, limit=1
                $region64: #{tpu_custom_call.1} parent=62 // loop_pre_header
                  _
                $region65: #{tpu_custom_call.1} parent=62 // loop_header
                  %s325 = sphi 0, %s329
                  %p326 = scmp.ge.s32.totalorder %s325, 1
                  %s330 = sphi %s289, %s289
                  %s331 = sphi %s297, %s297
                $region66: #{tpu_custom_call.1} parent=62 // loop_header_branch
                  %328 = sbr.rel (%p326) target = $region70
                $region67: #{tpu_custom_call.1} parent=62 // loop_body
                  %v332 = vld [vmem:[%s330] sm:$0xff]
                  %333 = vst [vmem:[%s331] sm:$0xff] %v332
                  %v334 = vld [vmem:[%s330 + $0x8] sm:$0xff]
                  %335 = vst [vmem:[%s331 + $0x10] sm:$0xff] %v334
                  %v336 = vld [vmem:[%s330 + $0x10] sm:$0xff]
                  %337 = vst [vmem:[%s331 + $0x20] sm:$0xff] %v336
                  %v338 = vld [vmem:[%s330 + $0x18] sm:$0xff]
                  %339 = vst [vmem:[%s331 + $0x30] sm:$0xff] %v338
                $region68: #{tpu_custom_call.1} parent=62 // loop_footer
                  %s329 = sadd.s32 1, %s325
                $region69: #{tpu_custom_call.1} parent=62 // loop_footer_branch
                  %324 = sbr.rel target = $region65
                $region70: #{tpu_custom_call.1} parent=62 // loop_exit
                  _
              $region63: #{tpu_custom_call.1} parent=47 // pred_fallthru
                _
              // Predicated region
              $region71: #{tpu_custom_call.1} parent=47 // pred_check
                _
              $region72: #{tpu_custom_call.1} parent=47 // pred_check_branch
                %341 = sbr.rel target = $region74
              $region73: #{tpu_custom_call.1} parent=47 // pred_region
                _
              $region74: #{tpu_custom_call.1} parent=47 // pred_fallthru
                _
            $region48: #{tpu_custom_call.1} parent=43 // pred_fallthru
              _
            // Predicated region
            $region49: #{tpu_custom_call.1} parent=43 // pred_check
              _
            $region50: #{tpu_custom_call.1} parent=43 // pred_check_branch
              %303 = sbr.rel target = $region52
            $region51: #{tpu_custom_call.1} parent=43 // pred_region
              %s305 = ssub.s32 256, 1
              loop: start=0, step=1, limit=1
              $region53: #{tpu_custom_call.1} parent=51 // loop_pre_header
                _
              $region54: #{tpu_custom_call.1} parent=51 // loop_header
                %s307 = sphi 0, %s311
                %p308 = scmp.ge.s32.totalorder %s307, 1
                %s312 = sphi %s289, %s289
                %s313 = sphi %s297, %s297
              $region55: #{tpu_custom_call.1} parent=51 // loop_header_branch
                %310 = sbr.rel (%p308) target = $region59
              $region56: #{tpu_custom_call.1} parent=51 // loop_body
                %v314 = vld [vmem:[%s312] sm:%s305]
                %315 = vst [vmem:[%s313] sm:%s305] %v314
                %v316 = vld [vmem:[%s312 + $0x8] sm:%s305]
                %317 = vst [vmem:[%s313 + $0x10] sm:%s305] %v316
                %v318 = vld [vmem:[%s312 + $0x10] sm:%s305]
                %319 = vst [vmem:[%s313 + $0x20] sm:%s305] %v318
                %v320 = vld [vmem:[%s312 + $0x18] sm:%s305]
                %321 = vst [vmem:[%s313 + $0x30] sm:%s305] %v320
              $region57: #{tpu_custom_call.1} parent=51 // loop_footer
                %s311 = sadd.s32 1, %s307
              $region58: #{tpu_custom_call.1} parent=51 // loop_footer_branch
                %306 = sbr.rel target = $region54
              $region59: #{tpu_custom_call.1} parent=51 // loop_exit
                _
            $region52: #{tpu_custom_call.1} parent=43 // pred_fallthru
              _
          $region44: #{tpu_custom_call.1} parent=39 // pred_fallthru
            _
          %342 = vnop
        $region40: #{tpu_custom_call.1} parent=31 // pred_fallthru
          _
      $region32: #{tpu_custom_call.1} parent=5 // pred_fallthru
        _
      %p343 = scmp.le.s32.totalorder 2, %s12
      // Predicated region
      $region75: #{tpu_custom_call.1} parent=5 // pred_check
        %p344 = pneg %p343
      $region76: #{tpu_custom_call.1} parent=5 // pred_check_branch
        %346 = sbr.rel (%p344) target = $region78
      $region77: #{tpu_custom_call.1} parent=5 // pred_region
        %s347 = ssub.s32 %s12, 2
        // Predicated region
        $region79: #{tpu_custom_call.1} parent=77 // pred_check
          %p348 = pneg %p125
        $region80: #{tpu_custom_call.1} parent=77 // pred_check_branch
          %350 = sbr.rel (%p348) target = $region82
        $region81: #{tpu_custom_call.1} parent=77 // pred_region
          %s351 = sand.u32 %s110, 1
          %s352 = sand.u32 %s110, 1
          %s353 = smul.addr %s352, 32
          %s354 = scalar_lea.vmem [#allocation4], %s353
        $region82: #{tpu_custom_call.1} parent=77 // pred_fallthru
          _
      $region78: #{tpu_custom_call.1} parent=5 // pred_fallthru
        _
    $region6: #{tpu_custom_call.1} parent=1 // loop_footer
      %s16 = sadd.s32 1, %s12
    $region7: #{tpu_custom_call.1} parent=1 // loop_footer_branch
      %11 = sbr.rel target = $region3
    $region8: #{tpu_custom_call.1} parent=1 // loop_exit
      _
    %355 = vsyncpa [#allocation3], 1
    %s356 = scalar_lea.sflag [#allocation3], 1
    %357 = vsyncpa %s356, 1

</llo_original>
